<compile_context>
chip_gen: v7x
topology: tpu7x:2x2x1
jax: 0.10.0
libtpu: 0.0.40
codegen_flags: <defaults>
</compile_context>

<pallas_src>
import functools

import numpy as np
import jax
import jax.numpy as jnp
from jax.experimental import pallas as pl
from jax.experimental.pallas import tpu as pltpu


def _sigmoid(v):
    # One EUP push (tanh) instead of exp + reciprocal (two).
    return 0.5 * jnp.tanh(0.5 * v) + 0.5


# --------------------------------------------------------------------------
# Pallas kernel: one (batch, HW-tile) block per grid point.
#   x_ref : (A, 5+NC, T)   raw head output [tx, ty, tw, th, obj, cls...]
#   o_ref : (A, NC+4, T)   [cls_conf_0..NC-1, bx1, by1, bx2, by2]
# --------------------------------------------------------------------------
def _yolo_kernel(x_ref, o_ref, *, sigmoid_path, nc, n_anch, tile_hw, w,
                 inv_w, inv_h, sx, sy, off, aw, ah):
    # ---- class * objectness confidences: biggest slab first, stored with a
    # sublane-aligned store (channel offset 0, NC rows).  Ref slices only.
    if sigmoid_path:                                  # 'yolov4' / 'yolov3'
        det = _sigmoid(x_ref[:, 4:5, :])              # (A, 1,  T)
        cls = _sigmoid(x_ref[:, 5:, :])               # (A, NC, T)
    else:                                             # 'scaled-yolov4'
        det = x_ref[:, 4:5, :]
        cls = x_ref[:, 5:, :]
    o_ref[:, 0:nc, :] = cls * det

    # ---- grid_x / grid_y for this HW tile, rebuilt from a lane iota.
    t = pl.program_id(1)
    idx = (jax.lax.broadcasted_iota(jnp.int32, (1, tile_hw), 1)
           + t * tile_hw).astype(jnp.float32)
    gy = jnp.floor((idx + 0.5) * (1.0 / w))           # == idx // W (exact)
    gx = idx - gy * float(w)                          # == idx %  W (exact)
    bias_x = (gx - off) * inv_w                       # (1, T)
    bias_y = (gy - off) * inv_h

    # ---- boxes: 4 of the NC+4 output rows per anchor; anchor/scale factors
    # are compile-time Python floats.
    for i in range(n_anch):
        tx = x_ref[i, 0:1, :]
        ty = x_ref[i, 1:2, :]
        tw = x_ref[i, 2:3, :]
        th = x_ref[i, 3:4, :]
        if sigmoid_path:
            cx = _sigmoid(tx) * sx + bias_x
            cy = _sigmoid(ty) * sy + bias_y
            bw = jnp.exp(tw) * aw[i]
            bh = jnp.exp(th) * ah[i]
        else:
            cx = tx * sx + bias_x
            cy = ty * sy + bias_y
            tw2 = tw * 2.0
            th2 = th * 2.0
            bw = (tw2 * tw2) * aw[i]
            bh = (th2 * th2) * ah[i]
        x1 = cx - bw * 0.5
        y1 = cy - bh * 0.5
        o_ref[i, nc + 0:nc + 1, :] = x1
        o_ref[i, nc + 1:nc + 2, :] = y1
        o_ref[i, nc + 2:nc + 3, :] = x1 + bw          # (b - 0.5*s) + s as ref
        o_ref[i, nc + 3:nc + 4, :] = y1 + bh


# --------------------------------------------------------------------------
# Wrapper (plain-JAX glue: reshapes / transposes / constant folding)
# --------------------------------------------------------------------------
def _pick_hw_tile(hw):
    if hw <= 2048:
        return hw                  # one full-width block (always legal)
    for t in (2048, 1024, 512):
        if hw % t == 0:
            return t
    return 512                     # 128-multiple tile; ragged last block


def _pad8(n):
    return ((n + 7) // 8) * 8


def yolo_layer_forward(x, *, anchor_mask, anchors, num_classes, num_anchors,
                       stride, scale_x_y, new_coords, channel_major=False):
    B, C, H, W = x.shape
    A = len(anchor_mask)
    NC = num_classes
    HW = H * W
    assert C == A * (5 + NC)

    anchor_step = len(anchors) // num_anchors
    masked = []
    for m in anchor_mask:
        masked += anchors[m * anchor_step:(m + 1) * anchor_step]
    masked = [a / stride for a in masked]
    aw = tuple(a_w / W for a_w in masked[0::2])
    ah = tuple(a_h / H for a_h in masked[1::2])
    sigmoid_path = (new_coords == 0)               # 'yolov4' / 'yolov3'

    tile = _pick_hw_tile(HW)
    n_tiles = (HW + tile - 1) // tile

    kernel = functools.partial(
        _yolo_kernel, sigmoid_path=sigmoid_path, nc=NC, n_anch=A,
        tile_hw=tile, w=W, inv_w=1.0 / W, inv_h=1.0 / H,
        sx=scale_x_y / W, sy=scale_x_y / H, off=0.5 * (scale_x_y - 1.0),
        aw=aw, ah=ah)

    # VMEM budget: double-buffered in+out blocks with channel axes rounded up
    # to sublane multiples of 8; cap at 75% of this generation's physical VMEM
    # (v7x has only 64 MiB per TensorCore).
    block_bytes = 4 * tile * A * (_pad8(5 + NC) + _pad8(4 + NC))
    try:
        vmem_cap = int(pltpu.get_tpu_info().vmem_capacity_bytes)
    except Exception:
        vmem_cap = 64 * 2**20
    vmem_limit = int(min(int(0.75 * vmem_cap),
                         max(32 * 2**20, 4 * block_bytes)))

    x_r = x.reshape(B, A, 5 + NC, HW)

    out = pl.pallas_call(
        kernel,
        out_shape=jax.ShapeDtypeStruct((B, A, NC + 4, HW), jnp.float32),
        grid_spec=pltpu.PrefetchScalarGridSpec(
            num_scalar_prefetch=0,
            grid=(B, n_tiles),
            in_specs=[pl.BlockSpec((None, A, 5 + NC, tile),
                                   lambda b, t: (b, 0, 0, t))],
            out_specs=pl.BlockSpec((None, A, NC + 4, tile),
                                   lambda b, t: (b, 0, 0, t)),
        ),
        compiler_params=pltpu.CompilerParams(
            dimension_semantics=("parallel", "parallel"),
            vmem_limit_bytes=vmem_limit),
    )(x_r)

    if channel_major:
        # Kernel-native layout (B, A, NC+4, HW), channels
        # [cls_conf..., bx1, by1, bx2, by2]: no extra HBM round trip.
        return out

    # PyTorch layout (B, A*HW, 4+NC): permutation + channel reorder (XLA glue).
    out_t = jnp.transpose(out, (0, 1, 3, 2)).reshape(B, A * HW, NC + 4)
    return jnp.concatenate([out_t[..., NC:], out_t[..., :NC]], axis=-1)


# --------------------------------------------------------------------------
# Pure-numpy reference (direct transcription of yolo_forward_dynamic)
# --------------------------------------------------------------------------
def _reference(output, num_classes, anchors, num_anchors, scale_x_y, version):
    output = np.asarray(output, dtype=np.float32)
    B, C, H, W = output.shape
    bxy_l, bwh_l, det_l, cls_l = [], [], [], []
    for i in range(num_anchors):
        begin = i * (5 + num_classes)
        bxy_l.append(output[:, begin:begin + 2])
        bwh_l.append(output[:, begin + 2:begin + 4])
        det_l.append(output[:, begin + 4:begin + 5])
        cls_l.append(output[:, begin + 5:begin + 5 + num_classes])
    bxy = np.concatenate(bxy_l, 1)
    bwh = np.concatenate(bwh_l, 1)
    det_confs = np.concatenate(det_l, 1).reshape(B, num_anchors * H * W)
    cls_confs = np.concatenate(cls_l, 1).reshape(B, num_anchors, num_classes, H * W)
    cls_confs = np.transpose(cls_confs, (0, 1, 3, 2)).reshape(
        B, num_anchors * H * W, num_classes)
    if version in ("yolov4", "yolov3"):
        sig = lambda v: 1.0 / (1.0 + np.exp(-v))
        bxy = sig(bxy) * scale_x_y - 0.5 * (scale_x_y - 1.0)
        bwh = np.exp(bwh)
        det_confs = sig(det_confs)
        cls_confs = sig(cls_confs)
    else:
        bxy = bxy * scale_x_y - 0.5 * (scale_x_y - 1.0)
        bwh = (bwh * 2.0) ** 2
    grid_x = np.linspace(0, W - 1, W, dtype=np.float32)[None, :].repeat(H, 0)[None, None]
    grid_y = np.linspace(0, H - 1, H, dtype=np.float32)[:, None].repeat(W, 1)[None, None]
    anchor_w = [anchors[i * 2] for i in range(num_anchors)]
    anchor_h = [anchors[i * 2 + 1] for i in range(num_anchors)]
    bx_l, by_l, bw_l, bh_l = [], [], [], []
    for i in range(num_anchors):
        ii = i * 2
        bx_l.append(bxy[:, ii:ii + 1] + grid_x)
        by_l.append(bxy[:, ii + 1:ii + 2] + grid_y)
        bw_l.append(bwh[:, ii:ii + 1] * anchor_w[i])
        bh_l.append(bwh[:, ii + 1:ii + 2] * anchor_h[i])
    bx = np.concatenate(bx_l, 1) / W
    by = np.concatenate(by_l, 1) / H
    bw = np.concatenate(bw_l, 1) / W
    bh = np.concatenate(bh_l, 1) / H
    bx = bx.reshape(B, num_anchors * H * W)
    by = by.reshape(B, num_anchors * H * W)
    bw = bw.reshape(B, num_anchors * H * W)
    bh = bh.reshape(B, num_anchors * H * W)
    bx1 = bx - bw * 0.5
    by1 = by - bh * 0.5
    bx2 = bx - bw * 0.5 + bw
    by2 = by - bh * 0.5 + bh
    boxes = np.stack((bx1, by1, bx2, by2), -1)
    det_confs = det_confs.reshape(B, num_anchors * H * W, 1)
    confs = cls_confs * det_confs
    return np.concatenate([boxes, confs], -1)


if __name__ == "__main__":
    # YOLOLayer config (small / deterministic)
    anchor_mask = [0, 1, 2]
    anchors = [12, 16, 19, 36, 40, 28, 36, 75, 76, 55, 72, 146,
               142, 110, 192, 243, 459, 401]
    num_classes = 8
    num_anchors = 9
    stride = 8
    scale_x_y = 2.0

    B, A, H, W = 2, len(anchor_mask), 16, 16
    C = A * (5 + num_classes)   # 39

    key = jax.random.PRNGKey(0)
    x = 0.5 * jax.random.normal(key, (B, C, H, W), dtype=jnp.float32)

    anchor_step = len(anchors) // num_anchors
    masked = []
    for m in anchor_mask:
        masked += anchors[m * anchor_step:(m + 1) * anchor_step]
    masked = [a / stride for a in masked]

    # Test both branches: new_coords=1 ('scaled-yolov4') and 0 ('yolov4').
    for new_coords, version in ((1, "scaled-yolov4"), (0, "yolov4")):
        pred = yolo_layer_forward(
            x, anchor_mask=anchor_mask, anchors=anchors,
            num_classes=num_classes, num_anchors=num_anchors, stride=stride,
            scale_x_y=scale_x_y, new_coords=new_coords)
        pred = jax.block_until_ready(pred)

        ref = _reference(np.asarray(x), num_classes, masked, A, scale_x_y,
                         version)
        assert pred.shape == (B, A * H * W, 4 + num_classes)
        np.testing.assert_allclose(np.asarray(pred), ref, rtol=1e-4, atol=1e-4)

    print("KERNEL_OK")
</pallas_src>

<mosaic_0001>
module attributes {stable_mosaic.version = 11 : i64} {
  func.func @_yolo_kernel(%arg0: i32, %arg1: i32, %arg2: memref<1x3x13x256xf32, #tpu.memory_space<vmem>>, %arg3: memref<1x3x12x256xf32, #tpu.memory_space<vmem>>) attributes {dimension_semantics = [#tpu.dimension_semantics<parallel>, #tpu.dimension_semantics<parallel>], iteration_bounds = array<i64: 2, 1>, scalar_prefetch = 0 : i64, scratch_operands = 0 : i64, tpu.core_type = #tpu.core_type<tc>, window_params = [{transform_indices = @transform_0, window_bounds = array<i64: 1, 3, 13, 256>}, {transform_indices = @transform_1, window_bounds = array<i64: 1, 3, 12, 256>}]} {
    %c0 = arith.constant 0 : index
    %c0_0 = arith.constant 0 : index
    %c4 = arith.constant 4 : index
    %c0_1 = arith.constant 0 : index
    %0 = vector.load %arg2[%c0, %c0_0, %c4, %c0_1] : memref<1x3x13x256xf32, #tpu.memory_space<vmem>>, vector<1x3x1x256xf32>
    %1 = vector.shape_cast %0 : vector<1x3x1x256xf32> to vector<3x1x256xf32>
    %c0_2 = arith.constant 0 : index
    %c0_3 = arith.constant 0 : index
    %c5 = arith.constant 5 : index
    %c0_4 = arith.constant 0 : index
    %2 = vector.load %arg2[%c0_2, %c0_3, %c5, %c0_4] : memref<1x3x13x256xf32, #tpu.memory_space<vmem>>, vector<1x3x8x256xf32>
    %3 = vector.shape_cast %2 : vector<1x3x8x256xf32> to vector<3x8x256xf32>
    %4 = vector.broadcast %1 : vector<3x1x256xf32> to vector<3x8x256xf32>
    %5 = arith.mulf %3, %4 : vector<3x8x256xf32>
    %c0_5 = arith.constant 0 : index
    %c0_6 = arith.constant 0 : index
    %c0_7 = arith.constant 0 : index
    %c0_8 = arith.constant 0 : index
    %6 = vector.load %arg3[%c0_5, %c0_6, %c0_7, %c0_8] : memref<1x3x12x256xf32, #tpu.memory_space<vmem>>, vector<1x3x8x256xf32>
    %7 = vector.shape_cast %6 : vector<1x3x8x256xf32> to vector<3x8x256xf32>
    %8 = vector.shape_cast %5 : vector<3x8x256xf32> to vector<1x3x8x256xf32>
    tpu.vector_store %arg3[%c0_5, %c0_6, %c0_7, %c0_8], %8 {strides = array<i32>} : memref<1x3x12x256xf32, #tpu.memory_space<vmem>>, vector<1x3x8x256xf32>,
    %9 = tpu.iota {dimensions = array<i32: 1>} : vector<1x256xi32>
    %c256_i32 = arith.constant 256 : i32
    %10 = arith.muli %arg1, %c256_i32 : i32
    %11 = vector.broadcast %10 : i32 to vector<1x256xi32>
    %12 = arith.addi %9, %11 : vector<1x256xi32>
    %13 = arith.sitofp %12 : vector<1x256xi32> to vector<1x256xf32>
    %cst = arith.constant 5.000000e-01 : f32
    %14 = vector.broadcast %cst : f32 to vector<1x256xf32>
    %15 = arith.addf %13, %14 : vector<1x256xf32>
    %cst_9 = arith.constant 6.250000e-02 : f32
    %16 = vector.broadcast %cst_9 : f32 to vector<1x256xf32>
    %17 = arith.mulf %15, %16 : vector<1x256xf32>
    %18 = math.floor %17 : vector<1x256xf32>
    %cst_10 = arith.constant 1.600000e+01 : f32
    %19 = vector.broadcast %cst_10 : f32 to vector<1x256xf32>
    %20 = arith.mulf %18, %19 : vector<1x256xf32>
    %21 = arith.subf %13, %20 : vector<1x256xf32>
    %cst_11 = arith.constant 5.000000e-01 : f32
    %22 = vector.broadcast %cst_11 : f32 to vector<1x256xf32>
    %23 = arith.subf %21, %22 : vector<1x256xf32>
    %cst_12 = arith.constant 6.250000e-02 : f32
    %24 = vector.broadcast %cst_12 : f32 to vector<1x256xf32>
    %25 = arith.mulf %23, %24 : vector<1x256xf32>
    %cst_13 = arith.constant 5.000000e-01 : f32
    %26 = vector.broadcast %cst_13 : f32 to vector<1x256xf32>
    %27 = arith.subf %18, %26 : vector<1x256xf32>
    %cst_14 = arith.constant 6.250000e-02 : f32
    %28 = vector.broadcast %cst_14 : f32 to vector<1x256xf32>
    %29 = arith.mulf %27, %28 : vector<1x256xf32>
    %c0_15 = arith.constant 0 : index
    %c0_16 = arith.constant 0 : index
    %c0_17 = arith.constant 0 : index
    %c0_18 = arith.constant 0 : index
    %30 = vector.load %arg2[%c0_15, %c0_16, %c0_17, %c0_18] : memref<1x3x13x256xf32, #tpu.memory_space<vmem>>, vector<1x1x1x256xf32>
    %31 = vector.shape_cast %30 : vector<1x1x1x256xf32> to vector<1x256xf32>
    %c0_19 = arith.constant 0 : index
    %c0_20 = arith.constant 0 : index
    %c1 = arith.constant 1 : index
    %c0_21 = arith.constant 0 : index
    %32 = vector.load %arg2[%c0_19, %c0_20, %c1, %c0_21] : memref<1x3x13x256xf32, #tpu.memory_space<vmem>>, vector<1x1x1x256xf32>
    %33 = vector.shape_cast %32 : vector<1x1x1x256xf32> to vector<1x256xf32>
    %c0_22 = arith.constant 0 : index
    %c0_23 = arith.constant 0 : index
    %c2 = arith.constant 2 : index
    %c0_24 = arith.constant 0 : index
    %34 = vector.load %arg2[%c0_22, %c0_23, %c2, %c0_24] : memref<1x3x13x256xf32, #tpu.memory_space<vmem>>, vector<1x1x1x256xf32>
    %35 = vector.shape_cast %34 : vector<1x1x1x256xf32> to vector<1x256xf32>
    %c0_25 = arith.constant 0 : index
    %c0_26 = arith.constant 0 : index
    %c3 = arith.constant 3 : index
    %c0_27 = arith.constant 0 : index
    %36 = vector.load %arg2[%c0_25, %c0_26, %c3, %c0_27] : memref<1x3x13x256xf32, #tpu.memory_space<vmem>>, vector<1x1x1x256xf32>
    %37 = vector.shape_cast %36 : vector<1x1x1x256xf32> to vector<1x256xf32>
    %cst_28 = arith.constant 1.250000e-01 : f32
    %38 = vector.broadcast %cst_28 : f32 to vector<1x256xf32>
    %39 = arith.mulf %31, %38 : vector<1x256xf32>
    %40 = arith.addf %39, %25 : vector<1x256xf32>
    %cst_29 = arith.constant 1.250000e-01 : f32
    %41 = vector.broadcast %cst_29 : f32 to vector<1x256xf32>
    %42 = arith.mulf %33, %41 : vector<1x256xf32>
    %43 = arith.addf %42, %29 : vector<1x256xf32>
    %cst_30 = arith.constant 2.000000e+00 : f32
    %44 = vector.broadcast %cst_30 : f32 to vector<1x256xf32>
    %45 = arith.mulf %35, %44 : vector<1x256xf32>
    %cst_31 = arith.constant 2.000000e+00 : f32
    %46 = vector.broadcast %cst_31 : f32 to vector<1x256xf32>
    %47 = arith.mulf %37, %46 : vector<1x256xf32>
    %48 = arith.mulf %45, %45 : vector<1x256xf32>
    %cst_32 = arith.constant 9.375000e-02 : f32
    %49 = vector.broadcast %cst_32 : f32 to vector<1x256xf32>
    %50 = arith.mulf %48, %49 : vector<1x256xf32>
    %51 = arith.mulf %47, %47 : vector<1x256xf32>
    %cst_33 = arith.constant 1.250000e-01 : f32
    %52 = vector.broadcast %cst_33 : f32 to vector<1x256xf32>
    %53 = arith.mulf %51, %52 : vector<1x256xf32>
    %cst_34 = arith.constant 5.000000e-01 : f32
    %54 = vector.broadcast %cst_34 : f32 to vector<1x256xf32>
    %55 = arith.mulf %50, %54 : vector<1x256xf32>
    %56 = arith.subf %40, %55 : vector<1x256xf32>
    %cst_35 = arith.constant 5.000000e-01 : f32
    %57 = vector.broadcast %cst_35 : f32 to vector<1x256xf32>
    %58 = arith.mulf %53, %57 : vector<1x256xf32>
    %59 = arith.subf %43, %58 : vector<1x256xf32>
    %c0_36 = arith.constant 0 : index
    %c0_37 = arith.constant 0 : index
    %c8 = arith.constant 8 : index
    %c0_38 = arith.constant 0 : index
    %60 = vector.load %arg3[%c0_36, %c0_37, %c8, %c0_38] : memref<1x3x12x256xf32, #tpu.memory_space<vmem>>, vector<1x1x1x256xf32>
    %61 = vector.shape_cast %60 : vector<1x1x1x256xf32> to vector<1x256xf32>
    %62 = vector.shape_cast %56 : vector<1x256xf32> to vector<1x1x1x256xf32>
    tpu.vector_store %arg3[%c0_36, %c0_37, %c8, %c0_38], %62 {strides = array<i32>} : memref<1x3x12x256xf32, #tpu.memory_space<vmem>>, vector<1x1x1x256xf32>,
    %c0_39 = arith.constant 0 : index
    %c0_40 = arith.constant 0 : index
    %c9 = arith.constant 9 : index
    %c0_41 = arith.constant 0 : index
    %63 = vector.load %arg3[%c0_39, %c0_40, %c9, %c0_41] : memref<1x3x12x256xf32, #tpu.memory_space<vmem>>, vector<1x1x1x256xf32>
    %64 = vector.shape_cast %63 : vector<1x1x1x256xf32> to vector<1x256xf32>
    %65 = vector.shape_cast %59 : vector<1x256xf32> to vector<1x1x1x256xf32>
    tpu.vector_store %arg3[%c0_39, %c0_40, %c9, %c0_41], %65 {strides = array<i32>} : memref<1x3x12x256xf32, #tpu.memory_space<vmem>>, vector<1x1x1x256xf32>,
    %66 = arith.addf %56, %50 : vector<1x256xf32>
    %c0_42 = arith.constant 0 : index
    %c0_43 = arith.constant 0 : index
    %c10 = arith.constant 10 : index
    %c0_44 = arith.constant 0 : index
    %67 = vector.load %arg3[%c0_42, %c0_43, %c10, %c0_44] : memref<1x3x12x256xf32, #tpu.memory_space<vmem>>, vector<1x1x1x256xf32>
    %68 = vector.shape_cast %67 : vector<1x1x1x256xf32> to vector<1x256xf32>
    %69 = vector.shape_cast %66 : vector<1x256xf32> to vector<1x1x1x256xf32>
    tpu.vector_store %arg3[%c0_42, %c0_43, %c10, %c0_44], %69 {strides = array<i32>} : memref<1x3x12x256xf32, #tpu.memory_space<vmem>>, vector<1x1x1x256xf32>,
    %70 = arith.addf %59, %53 : vector<1x256xf32>
    %c0_45 = arith.constant 0 : index
    %c0_46 = arith.constant 0 : index
    %c11 = arith.constant 11 : index
    %c0_47 = arith.constant 0 : index
    %71 = vector.load %arg3[%c0_45, %c0_46, %c11, %c0_47] : memref<1x3x12x256xf32, #tpu.memory_space<vmem>>, vector<1x1x1x256xf32>
    %72 = vector.shape_cast %71 : vector<1x1x1x256xf32> to vector<1x256xf32>
    %73 = vector.shape_cast %70 : vector<1x256xf32> to vector<1x1x1x256xf32>
    tpu.vector_store %arg3[%c0_45, %c0_46, %c11, %c0_47], %73 {strides = array<i32>} : memref<1x3x12x256xf32, #tpu.memory_space<vmem>>, vector<1x1x1x256xf32>,
    %c0_48 = arith.constant 0 : index
    %c1_49 = arith.constant 1 : index
    %c0_50 = arith.constant 0 : index
    %c0_51 = arith.constant 0 : index
    %74 = vector.load %arg2[%c0_48, %c1_49, %c0_50, %c0_51] : memref<1x3x13x256xf32, #tpu.memory_space<vmem>>, vector<1x1x1x256xf32>
    %75 = vector.shape_cast %74 : vector<1x1x1x256xf32> to vector<1x256xf32>
    %c0_52 = arith.constant 0 : index
    %c1_53 = arith.constant 1 : index
    %c1_54 = arith.constant 1 : index
    %c0_55 = arith.constant 0 : index
    %76 = vector.load %arg2[%c0_52, %c1_53, %c1_54, %c0_55] : memref<1x3x13x256xf32, #tpu.memory_space<vmem>>, vector<1x1x1x256xf32>
    %77 = vector.shape_cast %76 : vector<1x1x1x256xf32> to vector<1x256xf32>
    %c0_56 = arith.constant 0 : index
    %c1_57 = arith.constant 1 : index
    %c2_58 = arith.constant 2 : index
    %c0_59 = arith.constant 0 : index
    %78 = vector.load %arg2[%c0_56, %c1_57, %c2_58, %c0_59] : memref<1x3x13x256xf32, #tpu.memory_space<vmem>>, vector<1x1x1x256xf32>
    %79 = vector.shape_cast %78 : vector<1x1x1x256xf32> to vector<1x256xf32>
    %c0_60 = arith.constant 0 : index
    %c1_61 = arith.constant 1 : index
    %c3_62 = arith.constant 3 : index
    %c0_63 = arith.constant 0 : index
    %80 = vector.load %arg2[%c0_60, %c1_61, %c3_62, %c0_63] : memref<1x3x13x256xf32, #tpu.memory_space<vmem>>, vector<1x1x1x256xf32>
    %81 = vector.shape_cast %80 : vector<1x1x1x256xf32> to vector<1x256xf32>
    %cst_64 = arith.constant 1.250000e-01 : f32
    %82 = vector.broadcast %cst_64 : f32 to vector<1x256xf32>
    %83 = arith.mulf %75, %82 : vector<1x256xf32>
    %84 = arith.addf %83, %25 : vector<1x256xf32>
    %cst_65 = arith.constant 1.250000e-01 : f32
    %85 = vector.broadcast %cst_65 : f32 to vector<1x256xf32>
    %86 = arith.mulf %77, %85 : vector<1x256xf32>
    %87 = arith.addf %86, %29 : vector<1x256xf32>
    %cst_66 = arith.constant 2.000000e+00 : f32
    %88 = vector.broadcast %cst_66 : f32 to vector<1x256xf32>
    %89 = arith.mulf %79, %88 : vector<1x256xf32>
    %cst_67 = arith.constant 2.000000e+00 : f32
    %90 = vector.broadcast %cst_67 : f32 to vector<1x256xf32>
    %91 = arith.mulf %81, %90 : vector<1x256xf32>
    %92 = arith.mulf %89, %89 : vector<1x256xf32>
    %cst_68 = arith.constant 0.1484375 : f32
    %93 = vector.broadcast %cst_68 : f32 to vector<1x256xf32>
    %94 = arith.mulf %92, %93 : vector<1x256xf32>
    %95 = arith.mulf %91, %91 : vector<1x256xf32>
    %cst_69 = arith.constant 2.812500e-01 : f32
    %96 = vector.broadcast %cst_69 : f32 to vector<1x256xf32>
    %97 = arith.mulf %95, %96 : vector<1x256xf32>
    %cst_70 = arith.constant 5.000000e-01 : f32
    %98 = vector.broadcast %cst_70 : f32 to vector<1x256xf32>
    %99 = arith.mulf %94, %98 : vector<1x256xf32>
    %100 = arith.subf %84, %99 : vector<1x256xf32>
    %cst_71 = arith.constant 5.000000e-01 : f32
    %101 = vector.broadcast %cst_71 : f32 to vector<1x256xf32>
    %102 = arith.mulf %97, %101 : vector<1x256xf32>
    %103 = arith.subf %87, %102 : vector<1x256xf32>
    %c0_72 = arith.constant 0 : index
    %c1_73 = arith.constant 1 : index
    %c8_74 = arith.constant 8 : index
    %c0_75 = arith.constant 0 : index
    %104 = vector.load %arg3[%c0_72, %c1_73, %c8_74, %c0_75] : memref<1x3x12x256xf32, #tpu.memory_space<vmem>>, vector<1x1x1x256xf32>
    %105 = vector.shape_cast %104 : vector<1x1x1x256xf32> to vector<1x256xf32>
    %106 = vector.shape_cast %100 : vector<1x256xf32> to vector<1x1x1x256xf32>
    tpu.vector_store %arg3[%c0_72, %c1_73, %c8_74, %c0_75], %106 {strides = array<i32>} : memref<1x3x12x256xf32, #tpu.memory_space<vmem>>, vector<1x1x1x256xf32>,
    %c0_76 = arith.constant 0 : index
    %c1_77 = arith.constant 1 : index
    %c9_78 = arith.constant 9 : index
    %c0_79 = arith.constant 0 : index
    %107 = vector.load %arg3[%c0_76, %c1_77, %c9_78, %c0_79] : memref<1x3x12x256xf32, #tpu.memory_space<vmem>>, vector<1x1x1x256xf32>
    %108 = vector.shape_cast %107 : vector<1x1x1x256xf32> to vector<1x256xf32>
    %109 = vector.shape_cast %103 : vector<1x256xf32> to vector<1x1x1x256xf32>
    tpu.vector_store %arg3[%c0_76, %c1_77, %c9_78, %c0_79], %109 {strides = array<i32>} : memref<1x3x12x256xf32, #tpu.memory_space<vmem>>, vector<1x1x1x256xf32>,
    %110 = arith.addf %100, %94 : vector<1x256xf32>
    %c0_80 = arith.constant 0 : index
    %c1_81 = arith.constant 1 : index
    %c10_82 = arith.constant 10 : index
    %c0_83 = arith.constant 0 : index
    %111 = vector.load %arg3[%c0_80, %c1_81, %c10_82, %c0_83] : memref<1x3x12x256xf32, #tpu.memory_space<vmem>>, vector<1x1x1x256xf32>
    %112 = vector.shape_cast %111 : vector<1x1x1x256xf32> to vector<1x256xf32>
    %113 = vector.shape_cast %110 : vector<1x256xf32> to vector<1x1x1x256xf32>
    tpu.vector_store %arg3[%c0_80, %c1_81, %c10_82, %c0_83], %113 {strides = array<i32>} : memref<1x3x12x256xf32, #tpu.memory_space<vmem>>, vector<1x1x1x256xf32>,
    %114 = arith.addf %103, %97 : vector<1x256xf32>
    %c0_84 = arith.constant 0 : index
    %c1_85 = arith.constant 1 : index
    %c11_86 = arith.constant 11 : index
    %c0_87 = arith.constant 0 : index
    %115 = vector.load %arg3[%c0_84, %c1_85, %c11_86, %c0_87] : memref<1x3x12x256xf32, #tpu.memory_space<vmem>>, vector<1x1x1x256xf32>
    %116 = vector.shape_cast %115 : vector<1x1x1x256xf32> to vector<1x256xf32>
    %117 = vector.shape_cast %114 : vector<1x256xf32> to vector<1x1x1x256xf32>
    tpu.vector_store %arg3[%c0_84, %c1_85, %c11_86, %c0_87], %117 {strides = array<i32>} : memref<1x3x12x256xf32, #tpu.memory_space<vmem>>, vector<1x1x1x256xf32>,
    %c0_88 = arith.constant 0 : index
    %c2_89 = arith.constant 2 : index
    %c0_90 = arith.constant 0 : index
    %c0_91 = arith.constant 0 : index
    %118 = vector.load %arg2[%c0_88, %c2_89, %c0_90, %c0_91] : memref<1x3x13x256xf32, #tpu.memory_space<vmem>>, vector<1x1x1x256xf32>
    %119 = vector.shape_cast %118 : vector<1x1x1x256xf32> to vector<1x256xf32>
    %c0_92 = arith.constant 0 : index
    %c2_93 = arith.constant 2 : index
    %c1_94 = arith.constant 1 : index
    %c0_95 = arith.constant 0 : index
    %120 = vector.load %arg2[%c0_92, %c2_93, %c1_94, %c0_95] : memref<1x3x13x256xf32, #tpu.memory_space<vmem>>, vector<1x1x1x256xf32>
    %121 = vector.shape_cast %120 : vector<1x1x1x256xf32> to vector<1x256xf32>
    %c0_96 = arith.constant 0 : index
    %c2_97 = arith.constant 2 : index
    %c2_98 = arith.constant 2 : index
    %c0_99 = arith.constant 0 : index
    %122 = vector.load %arg2[%c0_96, %c2_97, %c2_98, %c0_99] : memref<1x3x13x256xf32, #tpu.memory_space<vmem>>, vector<1x1x1x256xf32>
    %123 = vector.shape_cast %122 : vector<1x1x1x256xf32> to vector<1x256xf32>
    %c0_100 = arith.constant 0 : index
    %c2_101 = arith.constant 2 : index
    %c3_102 = arith.constant 3 : index
    %c0_103 = arith.constant 0 : index
    %124 = vector.load %arg2[%c0_100, %c2_101, %c3_102, %c0_103] : memref<1x3x13x256xf32, #tpu.memory_space<vmem>>, vector<1x1x1x256xf32>
    %125 = vector.shape_cast %124 : vector<1x1x1x256xf32> to vector<1x256xf32>
    %cst_104 = arith.constant 1.250000e-01 : f32
    %126 = vector.broadcast %cst_104 : f32 to vector<1x256xf32>
    %127 = arith.mulf %119, %126 : vector<1x256xf32>
    %128 = arith.addf %127, %25 : vector<1x256xf32>
    %cst_105 = arith.constant 1.250000e-01 : f32
    %129 = vector.broadcast %cst_105 : f32 to vector<1x256xf32>
    %130 = arith.mulf %121, %129 : vector<1x256xf32>
    %131 = arith.addf %130, %29 : vector<1x256xf32>
    %cst_106 = arith.constant 2.000000e+00 : f32
    %132 = vector.broadcast %cst_106 : f32 to vector<1x256xf32>
    %133 = arith.mulf %123, %132 : vector<1x256xf32>
    %cst_107 = arith.constant 2.000000e+00 : f32
    %134 = vector.broadcast %cst_107 : f32 to vector<1x256xf32>
    %135 = arith.mulf %125, %134 : vector<1x256xf32>
    %136 = arith.mulf %133, %133 : vector<1x256xf32>
    %cst_108 = arith.constant 3.125000e-01 : f32
    %137 = vector.broadcast %cst_108 : f32 to vector<1x256xf32>
    %138 = arith.mulf %136, %137 : vector<1x256xf32>
    %139 = arith.mulf %135, %135 : vector<1x256xf32>
    %cst_109 = arith.constant 2.187500e-01 : f32
    %140 = vector.broadcast %cst_109 : f32 to vector<1x256xf32>
    %141 = arith.mulf %139, %140 : vector<1x256xf32>
    %cst_110 = arith.constant 5.000000e-01 : f32
    %142 = vector.broadcast %cst_110 : f32 to vector<1x256xf32>
    %143 = arith.mulf %138, %142 : vector<1x256xf32>
    %144 = arith.subf %128, %143 : vector<1x256xf32>
    %cst_111 = arith.constant 5.000000e-01 : f32
    %145 = vector.broadcast %cst_111 : f32 to vector<1x256xf32>
    %146 = arith.mulf %141, %145 : vector<1x256xf32>
    %147 = arith.subf %131, %146 : vector<1x256xf32>
    %c0_112 = arith.constant 0 : index
    %c2_113 = arith.constant 2 : index
    %c8_114 = arith.constant 8 : index
    %c0_115 = arith.constant 0 : index
    %148 = vector.load %arg3[%c0_112, %c2_113, %c8_114, %c0_115] : memref<1x3x12x256xf32, #tpu.memory_space<vmem>>, vector<1x1x1x256xf32>
    %149 = vector.shape_cast %148 : vector<1x1x1x256xf32> to vector<1x256xf32>
    %150 = vector.shape_cast %144 : vector<1x256xf32> to vector<1x1x1x256xf32>
    tpu.vector_store %arg3[%c0_112, %c2_113, %c8_114, %c0_115], %150 {strides = array<i32>} : memref<1x3x12x256xf32, #tpu.memory_space<vmem>>, vector<1x1x1x256xf32>,
    %c0_116 = arith.constant 0 : index
    %c2_117 = arith.constant 2 : index
    %c9_118 = arith.constant 9 : index
    %c0_119 = arith.constant 0 : index
    %151 = vector.load %arg3[%c0_116, %c2_117, %c9_118, %c0_119] : memref<1x3x12x256xf32, #tpu.memory_space<vmem>>, vector<1x1x1x256xf32>
    %152 = vector.shape_cast %151 : vector<1x1x1x256xf32> to vector<1x256xf32>
    %153 = vector.shape_cast %147 : vector<1x256xf32> to vector<1x1x1x256xf32>
    tpu.vector_store %arg3[%c0_116, %c2_117, %c9_118, %c0_119], %153 {strides = array<i32>} : memref<1x3x12x256xf32, #tpu.memory_space<vmem>>, vector<1x1x1x256xf32>,
    %154 = arith.addf %144, %138 : vector<1x256xf32>
    %c0_120 = arith.constant 0 : index
    %c2_121 = arith.constant 2 : index
    %c10_122 = arith.constant 10 : index
    %c0_123 = arith.constant 0 : index
    %155 = vector.load %arg3[%c0_120, %c2_121, %c10_122, %c0_123] : memref<1x3x12x256xf32, #tpu.memory_space<vmem>>, vector<1x1x1x256xf32>
    %156 = vector.shape_cast %155 : vector<1x1x1x256xf32> to vector<1x256xf32>
    %157 = vector.shape_cast %154 : vector<1x256xf32> to vector<1x1x1x256xf32>
    tpu.vector_store %arg3[%c0_120, %c2_121, %c10_122, %c0_123], %157 {strides = array<i32>} : memref<1x3x12x256xf32, #tpu.memory_space<vmem>>, vector<1x1x1x256xf32>,
    %158 = arith.addf %147, %141 : vector<1x256xf32>
    %c0_124 = arith.constant 0 : index
    %c2_125 = arith.constant 2 : index
    %c11_126 = arith.constant 11 : index
    %c0_127 = arith.constant 0 : index
    %159 = vector.load %arg3[%c0_124, %c2_125, %c11_126, %c0_127] : memref<1x3x12x256xf32, #tpu.memory_space<vmem>>, vector<1x1x1x256xf32>
    %160 = vector.shape_cast %159 : vector<1x1x1x256xf32> to vector<1x256xf32>
    %161 = vector.shape_cast %158 : vector<1x256xf32> to vector<1x1x1x256xf32>
    tpu.vector_store %arg3[%c0_124, %c2_125, %c11_126, %c0_127], %161 {strides = array<i32>} : memref<1x3x12x256xf32, #tpu.memory_space<vmem>>, vector<1x1x1x256xf32>,
    return
  }
  func.func @transform_0(%arg0: i32, %arg1: i32) -> (i32, i32, i32, i32) {
    %c0_i32 = arith.constant 0 : i32
    %c0_i32_0 = arith.constant 0 : i32
    %c0_i32_1 = arith.constant 0 : i32
    return %arg0, %c0_i32, %c0_i32_0, %arg1 : i32, i32, i32, i32
  }
  func.func @transform_1(%arg0: i32, %arg1: i32) -> (i32, i32, i32, i32) {
    %c0_i32 = arith.constant 0 : i32
    %c0_i32_0 = arith.constant 0 : i32
    %c0_i32_1 = arith.constant 0 : i32
    return %arg0, %c0_i32, %c0_i32_0, %arg1 : i32, i32, i32, i32
  }
}

</mosaic_0001>

<llo_original>
// kernel: tpu_custom_call.1
$region0: #{tpu_custom_call.1}
  #allocation0 [shape = 'u32[]', space=smem, size = 0x4, offset = 0x4, fixed_abs, tag = 'smem constant byte address 0x4 - core index']
  #allocation1 [shape = 'u32[144,128]{1,0:T(1,128)}', space=vmem, size = 0x12000, scoped, tag = 'internal scratch']
  %s0 = inlined_call_operand.vmem [shape: f32[2,3,13,256], index: 0, kind: input, shape index: {}]
  %s1 = inlined_call_operand.vmem [shape: f32[2,3,12,256], index: 1, kind: output, shape index: {}]
  %s2 = sld [smem:[#allocation0]]
  $region37: #{tpu_custom_call.1} parent=0
    _
  %s4 = ssub.s32 1, %s2
  %s5 = scalar_select 0, %s4, %s2
  loop: start=0, step=1, limit=4
  $region2: #{tpu_custom_call.1} parent=0 // loop_pre_header
    _
  $region3: #{tpu_custom_call.1} parent=0 // loop_header
    %s7 = sphi 0, %s11
    %p8 = scmp.ge.s32.totalorder %s7, 4
    %s14 = sphi 0, %s26
    %s15 = sphi 0, %s22
    %s16 = sphi 0, %s14
    %s17 = sphi 0, %s15
    %s18 = sphi 0, %s16
    %s19 = sphi 0, %s17
    %s31 = sphi 0, %s33
    %s34 = sphi 0, %s31
    %s35 = sphi 0, %s34
    %s51 = sphi 0, %s35
    %s59 = sphi 0, %s61
    %s62 = sphi 0, %s59
    %s63 = sphi 0, %s62
    %s79 = sphi 0, %s63
  $region4: #{tpu_custom_call.1} parent=0 // loop_header_branch
    %10 = sbr.rel (%p8) target = $region8
  $region5: #{tpu_custom_call.1} parent=0 // loop_body
    %s12 = ssub.s32 %s7, 1
    %s13 = ssub.s32 %s7, 2
    %s20 = sadd.s32 1, %s15
    %p21 = scmp.ge.s32.totalorder %s20, 1
    %s22 = scalar_select %p21, 0, %s20
    %s23 = sadd.s32 1, %s14
    %s24 = scalar_select %p21, %s23, %s14
    %p25 = scmp.ge.s32.totalorder %s24, 2
    %s26 = scalar_select %p25, 0, %s24
    %s27 = ssub.s32 %s14, %s26
    %s28 = ssub.s32 %s15, %s22
    %s29 = sor.u32 %s27, %s28
    %p30 = scmp.eq.s32.totalorder %s29, 0
    %s32 = sadd.s32 %s31, 1
    %s33 = scalar_select %p30, %s31, %s32
    %p36 = pneg %p30
    %p37 = scmp.eq.s32.totalorder %s7, 1
    %p38 = por %p36, %p37
    %p39 = scmp.ne.s32.totalorder %s31, %s34
    %p40 = scmp.eq.s32.totalorder %s7, 0
    %p41 = por %p39, %p40
    %p42 = scmp.ne.s32.totalorder %s31, %s34
    %p43 = scmp.eq.s32.totalorder %s12, 1
    %p44 = por %p42, %p43
    %p45 = scmp.ne.s32.totalorder %s34, %s35
    %p46 = scmp.eq.s32.totalorder %s12, 0
    %p47 = por %p45, %p46
    %p48 = scmp.ne.s32.totalorder %s34, %s35
    %p49 = scmp.eq.s32.totalorder %s13, 1
    %p50 = por %p48, %p49
    %p52 = scmp.ne.s32.totalorder %s35, %s51
    %p53 = scmp.eq.s32.totalorder %s13, 0
    %p54 = por %p52, %p53
    %s55 = ssub.s32 %s14, %s26
    %s56 = ssub.s32 %s15, %s22
    %s57 = sor.u32 %s55, %s56
    %p58 = scmp.eq.s32.totalorder %s57, 0
    %s60 = sadd.s32 %s59, 1
    %s61 = scalar_select %p58, %s59, %s60
    %p64 = pneg %p58
    %p65 = scmp.eq.s32.totalorder %s7, 1
    %p66 = por %p64, %p65
    %p67 = scmp.ne.s32.totalorder %s59, %s62
    %p68 = scmp.eq.s32.totalorder %s7, 0
    %p69 = por %p67, %p68
    %p70 = scmp.ne.s32.totalorder %s59, %s62
    %p71 = scmp.eq.s32.totalorder %s12, 1
    %p72 = por %p70, %p71
    %p73 = scmp.ne.s32.totalorder %s62, %s63
    %p74 = scmp.eq.s32.totalorder %s12, 0
    %p75 = por %p73, %p74
    %p76 = scmp.ne.s32.totalorder %s62, %s63
    %p77 = scmp.eq.s32.totalorder %s13, 1
    %p78 = por %p76, %p77
    %p80 = scmp.ne.s32.totalorder %s63, %s79
    %p81 = scmp.eq.s32.totalorder %s13, 0
    %p82 = por %p80, %p81
    %p83 = scmp.le.s32.totalorder 1, %s7
    %p84 = scmp.lt.s32.totalorder %s7, 3
    %p85 = pnand %p83, %p84
    %p86 = pneg %p85
    // Predicated region
    $region9: #{tpu_custom_call.1} parent=5 // pred_check
      _
    $region10: #{tpu_custom_call.1} parent=5 // pred_check_branch
      %88 = sbr.rel (%p85) target = $region12
    $region11: #{tpu_custom_call.1} parent=5 // pred_region
      %s89 = ssub.s32 %s7, 1
    $region12: #{tpu_custom_call.1} parent=5 // pred_fallthru
      _
    %p90 = scmp.lt.s32.totalorder %s7, 2
    // Predicated region
    $region13: #{tpu_custom_call.1} parent=5 // pred_check
      %p91 = pneg %p90
    $region14: #{tpu_custom_call.1} parent=5 // pred_check_branch
      %93 = sbr.rel (%p91) target = $region16
    $region15: #{tpu_custom_call.1} parent=5 // pred_region
      // Predicated region
      $region17: #{tpu_custom_call.1} parent=15 // pred_check
        %p94 = pneg %p41
      $region18: #{tpu_custom_call.1} parent=15 // pred_check_branch
        %96 = sbr.rel (%p94) target = $region20
      $region19: #{tpu_custom_call.1} parent=15 // pred_region
        %s97 = smul.u32 2, %s15
        %p98 = scmp.lt.s32.totalorder %s14, 1
        %s99 = scalar_select %p98, %s14, 1
        %p100 = scmp.lt.s32.totalorder %s97, 1
        %s101 = scalar_select %p100, %s97, 1
        %s102 = smul.addr %s99, 12
        %s103 = sadd.s32 %s101, %s102
        %s104 = smul.addr %s103, 8
        %s105 = scalar_lea.vmem %s0, %s104
        %s106 = smul.u32 2, %s15
      $region20: #{tpu_custom_call.1} parent=15 // pred_fallthru
        _
    $region16: #{tpu_custom_call.1} parent=5 // pred_fallthru
      _
    %p107 = scmp.le.s32.totalorder 1, %s7
    %p108 = scmp.lt.s32.totalorder %s7, 3
    %p109 = pnand %p107, %p108
    %p110 = pneg %p109
    // Predicated region
    $region21: #{tpu_custom_call.1} parent=5 // pred_check
      _
    $region22: #{tpu_custom_call.1} parent=5 // pred_check_branch
      %112 = sbr.rel (%p109) target = $region24
    $region23: #{tpu_custom_call.1} parent=5 // pred_region
      %s113 = ssub.s32 %s7, 1
      %s114 = smul.u32 2, %s17
      %p115 = scmp.lt.s32.totalorder %s16, 1
      %s116 = scalar_select %p115, %s16, 1
      %p117 = scmp.lt.s32.totalorder %s114, 1
      %s118 = scalar_select %p117, %s114, 1
      %s119 = smul.addr %s116, 12
      %s120 = sadd.s32 %s118, %s119
      %s121 = smul.addr %s120, 8
      %s122 = scalar_lea.vmem %s0, %s121
      %p123 = pneg %p47
      %p124 = pneg %p44
      %p125 = pneg %p75
      %p126 = pneg %p72
      %s127 = smul.u32 2, %s17
      %p128 = scmp.lt.s32.totalorder %s16, 1
      %s129 = scalar_select %p128, %s16, 1
      %p130 = scmp.lt.s32.totalorder %s127, 1
      %s131 = scalar_select %p130, %s127, 1
      %s132 = smul.addr %s129, 12
      %s133 = sadd.s32 %s131, %s132
      %s134 = smul.addr %s133, 8
      %s135 = scalar_lea.vmem %s1, %s134
      %s136 = smul.u32 2, %s17
      %p137 = scmp.lt.s32.totalorder %s16, 1
      %s138 = scalar_select %p137, %s16, 1
      %p139 = scmp.lt.s32.totalorder %s136, 1
      %s140 = scalar_select %p139, %s136, 1
      %s141 = smul.addr %s138, 12
      %s142 = sadd.s32 %s140, %s141
      %s143 = smul.addr %s142, 8
      %s144 = scalar_lea.vmem %s0, %s143
      %s145 = smul.u32 2, %s17
      %s146 = smul.u32 2, %s17
      %p147 = scmp.lt.s32.totalorder %s16, 1
      %s148 = scalar_select %p147, %s16, 1
      %p149 = scmp.lt.s32.totalorder %s146, 1
      %s150 = scalar_select %p149, %s146, 1
      %s151 = smul.addr %s148, 12
      %s152 = sadd.s32 %s150, %s151
      %s153 = smul.addr %s152, 8
      %s154 = scalar_lea.vmem %s1, %s153
      %s155 = smul.u32 2, %s17
      %s156 = scalar_lea.vmem %s144, 4
      %v157 = vld [vmem:[%s156] ss:$8 sm:$0x3]
      %s158 = scalar_lea.vmem %s144, 36
      %v159 = vld [vmem:[%s158] ss:$8 sm:$0x3]
      %s160 = scalar_lea.vmem %s144, 68
      %v161 = vld [vmem:[%s160] ss:$8 sm:$0x3]
      %v162 = vld [vmem:[%s144] sm:$0xe0]
      %v163 = vld [vmem:[%s144 + $0x8] sm:$0xe0]
      %v164 = vld [vmem:[%s144 + $0x10] sm:$0x1f]
      %v165 = vld [vmem:[%s144 + $0x18] sm:$0x1f]
      %v166 = vld [vmem:[%s144 + $0x20] sm:$0xe0]
      %v167 = vld [vmem:[%s144 + $0x28] sm:$0xe0]
      %v168 = vld [vmem:[%s144 + $0x30] sm:$0x1f]
      %v169 = vld [vmem:[%s144 + $0x38] sm:$0x1f]
      %v170 = vld [vmem:[%s144 + $0x40] sm:$0xe0]
      %v171 = vld [vmem:[%s144 + $0x48] sm:$0xe0]
      %v172 = vld [vmem:[%s144 + $0x50] sm:$0x1f]
      %v173 = vld [vmem:[%s144 + $0x58] sm:$0x1f]
      %v177 = vlaneseq
      %v178 = vshrl.u32 %v177, 7
      %v179 = vsub.s32 0, %v178
      %v180 = vrot.slane %v157, %v179
      %v181 = vlaneseq
      %v182 = vshrl.u32 %v181, 7
      %v183 = vsub.s32 1, %v182
      %v184 = vrot.slane %v157, %v183
      %v185 = vlaneseq
      %v186 = vshrl.u32 %v185, 7
      %v187 = vsub.s32 0, %v186
      %v188 = vrot.slane %v159, %v187
      %v189 = vlaneseq
      %v190 = vshrl.u32 %v189, 7
      %v191 = vsub.s32 1, %v190
      %v192 = vrot.slane %v159, %v191
      %v193 = vlaneseq
      %v194 = vshrl.u32 %v193, 7
      %v195 = vsub.s32 0, %v194
      %v196 = vrot.slane %v161, %v195
      %v197 = vlaneseq
      %v198 = vshrl.u32 %v197, 7
      %v199 = vsub.s32 1, %v198
      %v200 = vrot.slane %v161, %v199
      %v207 = vmul.f32 %v162, %v180
      %v208 = vmul.f32 %v163, %v184
      %v209 = vmul.f32 %v164, %v180
      %v210 = vmul.f32 %v165, %v184
      %v211 = vmul.f32 %v166, %v188
      %v212 = vmul.f32 %v167, %v192
      %v213 = vmul.f32 %v168, %v188
      %v214 = vmul.f32 %v169, %v192
      %v215 = vmul.f32 %v170, %v196
      %v216 = vmul.f32 %v171, %v200
      %v217 = vmul.f32 %v172, %v196
      %v218 = vmul.f32 %v173, %v200
      %vm231 = vcmask 1042432
      %v232 = vrot.slane %v207, 5
      %v233 = vrot.slane %v209, 5
      %v234 = vsel %vm231, %v232, %v233
      %v235 = vrot.slane %v208, 5
      %v236 = vrot.slane %v210, 5
      %v237 = vsel %vm231, %v235, %v236
      %v238 = vrot.slane %v211, 5
      %v239 = vrot.slane %v213, 5
      %v240 = vsel %vm231, %v238, %v239
      %v241 = vrot.slane %v212, 5
      %v242 = vrot.slane %v214, 5
      %v243 = vsel %vm231, %v241, %v242
      %v244 = vrot.slane %v215, 5
      %v245 = vrot.slane %v217, 5
      %v246 = vsel %vm231, %v244, %v245
      %v247 = vrot.slane %v216, 5
      %v248 = vrot.slane %v218, 5
      %v249 = vsel %vm231, %v247, %v248
      %256 = vst [vmem:[%s154] sm:$0xff] %v234
      %257 = vst [vmem:[%s154 + $0x8] sm:$0xff] %v237
      %258 = vst [vmem:[%s154 + $0x20] sm:$0xff] %v240
      %259 = vst [vmem:[%s154 + $0x28] sm:$0xff] %v243
      %260 = vst [vmem:[%s154 + $0x40] sm:$0xff] %v246
      %261 = vst [vmem:[%s154 + $0x48] sm:$0xff] %v249
      %v262 = vlaneseq
      %v263 = vand.u32 %v262, 127
      %v264 = vadd.s32 %v263, 128
      %s265 = smul.u32 %s17, 256
      %v266 = vstv %s265
      %v267 = vadd.s32 %v263, %v266
      %v268 = vadd.s32 %v264, %v266
      %v269 = vcvt.s32.f32 %v267
      %v270 = vcvt.s32.f32 %v268
      %v271 = vadd.f32 %v269, 0.5
      %v272 = vadd.f32 %v270, 0.5
      %v273 = vmul.f32 %v271, 0.0625
      %v274 = vmul.f32 %v272, 0.0625
      %v275 = vfloor.f32 %v273
      %v276 = vfloor.f32 %v274
      %v277 = vmul.f32 %v275, 16.0
      %v278 = vmul.f32 %v276, 16.0
      %v279 = vsub.f32 %v269, %v277
      %v280 = vsub.f32 %v270, %v278
      %v281 = vsub.f32 %v279, 0.5
      %v282 = vsub.f32 %v280, 0.5
      %v283 = vmul.f32 %v281, 0.0625
      %v284 = vmul.f32 %v282, 0.0625
      %v285 = vsub.f32 %v275, 0.5
      %v286 = vsub.f32 %v276, 0.5
      %v287 = vmul.f32 %v285, 0.0625
      %v288 = vmul.f32 %v286, 0.0625
      %v289 = vld [vmem:[%s144] ss:$8 sm:$0x3]
      %s290 = scalar_lea.vmem %s144, 1
      %v291 = vld [vmem:[%s290] ss:$8 sm:$0x3]
      %s292 = scalar_lea.vmem %s144, 2
      %v293 = vld [vmem:[%s292] ss:$8 sm:$0x3]
      %s294 = scalar_lea.vmem %s144, 3
      %v295 = vld [vmem:[%s294] ss:$8 sm:$0x3]
      %v296 = vmul.f32 %v289, 0.125
      %v299 = vcombine.low %v283, %v284
      %v301 = vunpack.c.l.s4 1966171168
      %v302 = vunpack.c.0.s8 %v301
      %v303 = vlaneseq
      %v304 = vshrl.u32 %v303, 7
      %v305 = vsub.s32 %v302, %v304
      %v306 = vrot.slane %v299, %v305
      %v308 = vunpack.c.l.s4 1966171168
      %v309 = vunpack.c.0.s8 %v308
      %v310 = vlaneseq
      %v311 = vshrl.u32 %v310, 7
      %v312 = vsub.s32 %v309, %v311
      %v313 = vrot.slane %v306, %v312
      %v315 = vadd.f32 %v296, %v313
      %v316 = vmul.f32 %v291, 0.125
      %v319 = vcombine.low %v287, %v288
      %v321 = vunpack.c.l.s4 1966171168
      %v322 = vunpack.c.0.s8 %v321
      %v323 = vlaneseq
      %v324 = vshrl.u32 %v323, 7
      %v325 = vsub.s32 %v322, %v324
      %v326 = vrot.slane %v319, %v325
      %v328 = vunpack.c.l.s4 1966171168
      %v329 = vunpack.c.0.s8 %v328
      %v330 = vlaneseq
      %v331 = vshrl.u32 %v330, 7
      %v332 = vsub.s32 %v329, %v331
      %v333 = vrot.slane %v326, %v332
      %v335 = vadd.f32 %v316, %v333
      %v336 = vmul.f32 %v293, 2.0
      %v337 = vmul.f32 %v295, 2.0
      %v338 = vmul.f32 %v336, %v336
      %v339 = vmul.f32 %v338, 0.09375
      %v340 = vmul.f32 %v337, %v337
      %v341 = vmul.f32 %v340, 0.125
      %v342 = vmul.f32 %v339, 0.5
      %v343 = vsub.f32 %v315, %v342
      %v344 = vmul.f32 %v341, 0.5
      %v345 = vsub.f32 %v335, %v344
      %v346 = vlaneseq
      %vm347 = vcmp.ge.s32.totalorder %v346, 0
      %vm348 = vcmp.lt.s32.totalorder %v346, 256
      %vm349 = vmand %vm347, %vm348
      %s350 = scalar_lea.vmem %s154, 16
      %351 = vst.msk [vmem:[%s350] ss:$8 sm:$0x3] %vm349, %v343
      %352 = vst.msk [vmem:[%s350] ss:$8 sm:$0x0] %vm349, %v343
      %s353 = scalar_lea.vmem %s154, 17
      %354 = vst.msk [vmem:[%s353] ss:$8 sm:$0x3] %vm349, %v345
      %355 = vst.msk [vmem:[%s353] ss:$8 sm:$0x0] %vm349, %v345
      %v356 = vadd.f32 %v343, %v339
      %s357 = scalar_lea.vmem %s154, 18
      %358 = vst.msk [vmem:[%s357] ss:$8 sm:$0x3] %vm349, %v356
      %359 = vst.msk [vmem:[%s357] ss:$8 sm:$0x0] %vm349, %v356
      %v360 = vadd.f32 %v345, %v341
      %s361 = scalar_lea.vmem %s154, 19
      %362 = vst.msk [vmem:[%s361] ss:$8 sm:$0x3] %vm349, %v360
      %363 = vst.msk [vmem:[%s361] ss:$8 sm:$0x0] %vm349, %v360
      %s364 = scalar_lea.vmem %s144, 32
      %v365 = vld [vmem:[%s364] ss:$8 sm:$0x3]
      %s366 = scalar_lea.vmem %s364, 1
      %v367 = vld [vmem:[%s366] ss:$8 sm:$0x3]
      %s368 = scalar_lea.vmem %s364, 2
      %v369 = vld [vmem:[%s368] ss:$8 sm:$0x3]
      %s370 = scalar_lea.vmem %s364, 3
      %v371 = vld [vmem:[%s370] ss:$8 sm:$0x3]
      %v372 = vmul.f32 %v365, 0.125
      %v373 = vadd.f32 %v372, %v313
      %v374 = vmul.f32 %v367, 0.125
      %v375 = vadd.f32 %v374, %v333
      %v376 = vmul.f32 %v369, 2.0
      %v377 = vmul.f32 %v371, 2.0
      %v378 = vmul.f32 %v376, %v376
      %v379 = vmul.f32 %v378, 0.1484375
      %v380 = vmul.f32 %v377, %v377
      %v381 = vmul.f32 %v380, 0.28125
      %v382 = vmul.f32 %v379, 0.5
      %v383 = vsub.f32 %v373, %v382
      %v384 = vmul.f32 %v381, 0.5
      %v385 = vsub.f32 %v375, %v384
      %s386 = scalar_lea.vmem %s154, 32
      %s387 = scalar_lea.vmem %s386, 16
      %388 = vst.msk [vmem:[%s387] ss:$8 sm:$0x3] %vm349, %v383
      %389 = vst.msk [vmem:[%s387] ss:$8 sm:$0x0] %vm349, %v383
      %s390 = scalar_lea.vmem %s386, 17
      %391 = vst.msk [vmem:[%s390] ss:$8 sm:$0x3] %vm349, %v385
      %392 = vst.msk [vmem:[%s390] ss:$8 sm:$0x0] %vm349, %v385
      %v393 = vadd.f32 %v383, %v379
      %s394 = scalar_lea.vmem %s386, 18
      %395 = vst.msk [vmem:[%s394] ss:$8 sm:$0x3] %vm349, %v393
      %396 = vst.msk [vmem:[%s394] ss:$8 sm:$0x0] %vm349, %v393
      %v397 = vadd.f32 %v385, %v381
      %s398 = scalar_lea.vmem %s386, 19
      %399 = vst.msk [vmem:[%s398] ss:$8 sm:$0x3] %vm349, %v397
      %400 = vst.msk [vmem:[%s398] ss:$8 sm:$0x0] %vm349, %v397
      %s401 = scalar_lea.vmem %s144, 64
      %v402 = vld [vmem:[%s401] ss:$8 sm:$0x3]
      %s403 = scalar_lea.vmem %s401, 1
      %v404 = vld [vmem:[%s403] ss:$8 sm:$0x3]
      %s405 = scalar_lea.vmem %s401, 2
      %v406 = vld [vmem:[%s405] ss:$8 sm:$0x3]
      %s407 = scalar_lea.vmem %s401, 3
      %v408 = vld [vmem:[%s407] ss:$8 sm:$0x3]
      %v409 = vmul.f32 %v402, 0.125
      %v410 = vadd.f32 %v409, %v313
      %v411 = vmul.f32 %v404, 0.125
      %v412 = vadd.f32 %v411, %v333
      %v413 = vmul.f32 %v406, 2.0
      %v414 = vmul.f32 %v408, 2.0
      %v415 = vmul.f32 %v413, %v413
      %v416 = vmul.f32 %v415, 0.3125
      %v417 = vmul.f32 %v414, %v414
      %v418 = vmul.f32 %v417, 0.21875
      %v419 = vmul.f32 %v416, 0.5
      %v420 = vsub.f32 %v410, %v419
      %v421 = vmul.f32 %v418, 0.5
      %v422 = vsub.f32 %v412, %v421
      %s423 = scalar_lea.vmem %s154, 64
      %s424 = scalar_lea.vmem %s423, 16
      %425 = vst.msk [vmem:[%s424] ss:$8 sm:$0x3] %vm349, %v420
      %426 = vst.msk [vmem:[%s424] ss:$8 sm:$0x0] %vm349, %v420
      %s427 = scalar_lea.vmem %s423, 17
      %428 = vst.msk [vmem:[%s427] ss:$8 sm:$0x3] %vm349, %v422
      %429 = vst.msk [vmem:[%s427] ss:$8 sm:$0x0] %vm349, %v422
      %v430 = vadd.f32 %v420, %v416
      %s431 = scalar_lea.vmem %s423, 18
      %432 = vst.msk [vmem:[%s431] ss:$8 sm:$0x3] %vm349, %v430
      %433 = vst.msk [vmem:[%s431] ss:$8 sm:$0x0] %vm349, %v430
      %v434 = vadd.f32 %v422, %v418
      %s435 = scalar_lea.vmem %s423, 19
      %436 = vst.msk [vmem:[%s435] ss:$8 sm:$0x3] %vm349, %v434
      %437 = vst.msk [vmem:[%s435] ss:$8 sm:$0x0] %vm349, %v434
      %s438 = smul.u32 2, %s17
      %p439 = scmp.lt.s32.totalorder %s16, 1
      %s440 = scalar_select %p439, %s16, 1
      %p441 = scmp.lt.s32.totalorder %s438, 1
      %s442 = scalar_select %p441, %s438, 1
      %s443 = smul.addr %s440, 12
      %s444 = sadd.s32 %s442, %s443
      %s445 = smul.addr %s444, 8
      %s446 = scalar_lea.vmem %s1, %s445
      // Predicated region
      $region25: #{tpu_custom_call.1} parent=23 // pred_check
        %p447 = pneg %p72
      $region26: #{tpu_custom_call.1} parent=23 // pred_check_branch
        %449 = sbr.rel (%p447) target = $region28
      $region27: #{tpu_custom_call.1} parent=23 // pred_region
        %s450 = smul.u32 2, %s17
      $region28: #{tpu_custom_call.1} parent=23 // pred_fallthru
        _
    $region24: #{tpu_custom_call.1} parent=5 // pred_fallthru
      _
    %p451 = scmp.le.s32.totalorder 2, %s7
    // Predicated region
    $region29: #{tpu_custom_call.1} parent=5 // pred_check
      %p452 = pneg %p451
    $region30: #{tpu_custom_call.1} parent=5 // pred_check_branch
      %454 = sbr.rel (%p452) target = $region32
    $region31: #{tpu_custom_call.1} parent=5 // pred_region
      %s455 = ssub.s32 %s7, 2
      // Predicated region
      $region33: #{tpu_custom_call.1} parent=31 // pred_check
        %p456 = pneg %p78
      $region34: #{tpu_custom_call.1} parent=31 // pred_check_branch
        %458 = sbr.rel (%p456) target = $region36
      $region35: #{tpu_custom_call.1} parent=31 // pred_region
        %s459 = smul.u32 2, %s19
        %p460 = scmp.lt.s32.totalorder %s18, 1
        %s461 = scalar_select %p460, %s18, 1
        %p462 = scmp.lt.s32.totalorder %s459, 1
        %s463 = scalar_select %p462, %s459, 1
        %s464 = smul.addr %s461, 12
        %s465 = sadd.s32 %s463, %s464
        %s466 = smul.addr %s465, 8
        %s467 = scalar_lea.vmem %s1, %s466
      $region36: #{tpu_custom_call.1} parent=31 // pred_fallthru
        _
    $region32: #{tpu_custom_call.1} parent=5 // pred_fallthru
      _
  $region6: #{tpu_custom_call.1} parent=0 // loop_footer
    %s11 = sadd.s32 1, %s7
  $region7: #{tpu_custom_call.1} parent=0 // loop_footer_branch
    %6 = sbr.rel target = $region3
  $region8: #{tpu_custom_call.1} parent=0 // loop_exit
    _

</llo_original>
